<compile_context>
chip_gen: v7x
topology: tpu7x:2x2x1
jax: 0.10.0
libtpu: 0.0.40
codegen_flags: <defaults>
</compile_context>

<pallas_src>
import functools
import math

import numpy as np

import jax
import jax.numpy as jnp
from jax.experimental import pallas as pl
from jax.experimental.pallas import tpu as pltpu

# VMEM budget: sized for v7x (64 MiB physical per TensorCore); also raises the
# 16/32 MiB scoped defaults on v5e/v6e (128 MiB physical) so 512-row tiles fit.
_VMEM_LIMIT = 64 * 1024 * 1024
_LEAKY_SLOPE = 0.1            # TODO(synk): `Conv` source not provided; LeakyReLU(0.1) assumed.
_ACT_DTYPE = jnp.bfloat16     # activations / weights bf16, all accumulation f32.


def _cparams(n_parallel):
    return pltpu.CompilerParams(
        dimension_semantics=("parallel",) * n_parallel,
        vmem_limit_bytes=_VMEM_LIMIT)


def _pick_tile(m, cap=512):
    """Largest row tile <= cap that evenly divides m (multiple of 8 when tiling)."""
    if m <= cap:
        return m
    t = cap - (cap % 8)
    while t >= 8:
        if m % t == 0:
            return t
        t -= 8
    return m


# --------------------------------------------------------------------------
# Fused chain of 1x1 convs:  x @ W1 (+b1, act) @ W2 (+b2, act) ... -> out
# --------------------------------------------------------------------------

def _conv1x1_chain_kernel(*refs, n_layers, acts):
    # refs = (x_ref, w1, b1, ..., wL, bL, o_ref); one row-tile per grid step.
    x_ref = refs[0]
    o_ref = refs[-1]
    y = x_ref[...]                                   # (tm, K0) bf16
    for li in range(n_layers):
        w = refs[1 + 2 * li][...]                    # (K, N) bf16, resident
        b = refs[2 + 2 * li][...].astype(jnp.float32)  # (1, N) f32, resident
        k = w.shape[0]
        if k <= 8:
            # Tiny contraction depth (e.g. cin=3 Focus stand-in): VPU FMAs
            # instead of a depth-padded MXU pass.
            yf = y.astype(jnp.float32)
            wf = w.astype(jnp.float32)
            acc = yf[:, 0:1] * wf[0:1, :]
            for ci in range(1, k):
                acc = acc + yf[:, ci:ci + 1] * wf[ci:ci + 1, :]
        else:
            acc = jnp.dot(y, w, preferred_element_type=jnp.float32)
        acc = acc + b
        if acts[li]:
            acc = jnp.where(acc > 0, acc, _LEAKY_SLOPE * acc)   # f32 epilogue
        if li == n_layers - 1:
            o_ref[...] = acc.astype(o_ref.dtype)
        else:
            y = acc.astype(_ACT_DTYPE)               # stays in VMEM/vregs


def conv1x1_chain(x, layers, out_dtype=None):
    """layers: sequence of (w, b, act) applied back-to-back, fused in one kernel."""
    n, h, wd, c = x.shape
    m = n * h * wd
    tm = _pick_tile(m)
    out_dtype = _ACT_DTYPE if out_dtype is None else out_dtype

    x2 = x.reshape(m, c).astype(_ACT_DTYPE)
    in_specs = [pl.BlockSpec((tm, c), lambda i: (i, 0))]
    args = [x2]
    acts = []
    for (w, b, act) in layers:
        kin, kout = w.shape
        in_specs.append(pl.BlockSpec((kin, kout), lambda i: (0, 0)))  # resident weight
        in_specs.append(pl.BlockSpec((1, kout), lambda i: (0, 0)))    # resident bias
        args.append(w.astype(_ACT_DTYPE))
        args.append(b.reshape(1, kout).astype(jnp.float32))
        acts.append(bool(act))
    n_out = layers[-1][0].shape[1]

    kern = functools.partial(_conv1x1_chain_kernel,
                             n_layers=len(layers), acts=tuple(acts))
    y = pl.pallas_call(
        kern,
        grid=(m // tm,),
        in_specs=in_specs,
        out_specs=pl.BlockSpec((tm, n_out), lambda i: (i, 0)),
        out_shape=jax.ShapeDtypeStruct((m, n_out), out_dtype),
        compiler_params=_cparams(1),
    )(*args)
    return y.reshape(n, h, wd, n_out)


def conv1x1(x, w, b, act=True, out_dtype=None):
    return conv1x1_chain(x, [(w, b, act)], out_dtype=out_dtype)


# --------------------------------------------------------------------------
# Fused 3x3 SAME conv (no im2col in HBM)
# --------------------------------------------------------------------------

def _conv3x3_kernel(x_ref, w_ref, b_ref, o_ref, *, h, w, c, act):
    # x_ref: (1, h+2, w+2, c) halo-padded image tile (bf16)
    # w_ref: (9*c, n_out) bf16 resident; b_ref: (1, n_out) f32 resident
    bias = b_ref[...].astype(jnp.float32)
    n_out = b_ref.shape[1]
    for y in range(h):
        acc = jnp.zeros((w, n_out), jnp.float32)
        for dy in range(3):
            for dx in range(3):
                tap = x_ref[0, y + dy, dx:dx + w, :]                 # (w, c)
                wk = w_ref[(dy * 3 + dx) * c:(dy * 3 + dx + 1) * c, :]
                acc = acc + jnp.dot(tap, wk, preferred_element_type=jnp.float32)
        acc = acc + bias
        if act:
            acc = jnp.where(acc > 0, acc, _LEAKY_SLOPE * acc)
        o_ref[0, y] = acc.astype(o_ref.dtype)


def conv3x3(x, w, b, act=True):
    # TODO(synk): `Conv` (ksize=3) source not provided; stride=1, pad=1 SAME conv
    # with LeakyReLU(0.1) assumed.
    # TODO(synk): at large H this should tile output rows with a 1-row halo; at
    # these head resolutions a whole image fits VMEM comfortably.
    n, h, wd, c = x.shape
    n_out = w.shape[1]
    xp = jnp.pad(x.astype(_ACT_DTYPE), ((0, 0), (1, 1), (1, 1), (0, 0)))
    kern = functools.partial(_conv3x3_kernel, h=h, w=wd, c=c, act=act)
    return pl.pallas_call(
        kern,
        grid=(n,),
        in_specs=[pl.BlockSpec((1, h + 2, wd + 2, c), lambda i: (i, 0, 0, 0)),
                  pl.BlockSpec((9 * c, n_out), lambda i: (0, 0)),
                  pl.BlockSpec((1, n_out), lambda i: (0, 0))],
        out_specs=pl.BlockSpec((1, h, wd, n_out), lambda i: (i, 0, 0, 0)),
        out_shape=jax.ShapeDtypeStruct((n, h, wd, n_out), _ACT_DTYPE),
        compiler_params=_cparams(1),
    )(xp, w.astype(_ACT_DTYPE), b.reshape(1, n_out).astype(jnp.float32))


# --------------------------------------------------------------------------
# 2x2 max-pool, 4-way max inside the kernel
# --------------------------------------------------------------------------

def _maxpool2_kernel(x_ref, o_ref, *, c):
    # x_ref: (1, H/2, 2, W/2, 2*c) -- row-pair split, column-pair packed in lanes.
    a = x_ref[0, :, 0, :, :c]
    b = x_ref[0, :, 0, :, c:]
    d0 = x_ref[0, :, 1, :, :c]
    d1 = x_ref[0, :, 1, :, c:]
    o_ref[0] = jnp.maximum(jnp.maximum(a, b), jnp.maximum(d0, d1))


def maxpool2(x):
    # nn.MaxPool2d(kernel_size=2, stride=2, ceil_mode=True).  Even H/W are used
    # here so ceil_mode has no effect.
    # TODO(synk): odd H/W (ceil_mode edge padding) not handled.
    n, h, wd, c = x.shape
    h2, w2 = h // 2, wd // 2
    xr = x.reshape(n, h2, 2, w2, 2 * c)          # free view; pair dims exposed
    kern = functools.partial(_maxpool2_kernel, c=c)
    return pl.pallas_call(
        kern,
        grid=(n,),
        in_specs=[pl.BlockSpec((1, h2, 2, w2, 2 * c), lambda i: (i, 0, 0, 0, 0))],
        out_specs=pl.BlockSpec((1, h2, w2, c), lambda i: (i, 0, 0, 0)),
        out_shape=jax.ShapeDtypeStruct((n, h2, w2, c), x.dtype),
        compiler_params=_cparams(1),
    )(xr)


# --------------------------------------------------------------------------
# Bilinear x2 upsample (align_corners=True) fused with the residual add
# --------------------------------------------------------------------------

def _interp_matrix_np(s_in, s_out):
    # 1-D weights of F.interpolate(mode='bilinear', align_corners=True).
    if s_in == 1:
        return np.ones((s_out, 1), np.float32)
    m = np.zeros((s_out, s_in), np.float32)
    scale = float(s_in - 1) / float(s_out - 1)
    for i in range(s_out):
        src = i * scale
        lo = min(int(math.floor(src)), s_in - 2)
        fr = src - lo
        m[i, lo] += 1.0 - fr
        m[i, lo + 1] += fr
    return m


def _upsample2_add_kernel(x_ref, aw_ref, r_ref, o_ref, *, h, w):
    # H direction: static per-output-row lerp (weights are trace-time Python
    # floats -> pure VPU).  W direction: one small resident interpolation
    # matmul per output row.  Residual added in the epilogue before the single
    # store; no XLA transposes, no separate add kernel.
    aw = aw_ref[...]                                   # (2w, w) f32, resident
    for i2 in range(2 * h):
        if h == 1:
            row = x_ref[0, 0].astype(jnp.float32)
        else:
            src = i2 * float(h - 1) / float(2 * h - 1)
            lo = min(int(math.floor(src)), h - 2)
            fr = src - float(lo)
            row = ((1.0 - fr) * x_ref[0, lo].astype(jnp.float32)
                   + fr * x_ref[0, lo + 1].astype(jnp.float32))       # (w, C)
        out_row = jnp.dot(aw, row, preferred_element_type=jnp.float32)  # (2w, C)
        out_row = out_row + r_ref[0, i2].astype(jnp.float32)
        o_ref[0, i2] = out_row.astype(o_ref.dtype)


def upsample2_add(x, res):
    # == UpSample(scale_factor=2, mode='bilinear', align_corners=True)(x) + res
    n, h, w, c = x.shape
    aw = jnp.asarray(_interp_matrix_np(w, 2 * w))
    kern = functools.partial(_upsample2_add_kernel, h=h, w=w)
    return pl.pallas_call(
        kern,
        grid=(n,),
        in_specs=[pl.BlockSpec((1, h, w, c), lambda i: (i, 0, 0, 0)),
                  pl.BlockSpec((2 * w, w), lambda i: (0, 0)),
                  pl.BlockSpec((1, 2 * h, 2 * w, c), lambda i: (i, 0, 0, 0))],
        out_specs=pl.BlockSpec((1, 2 * h, 2 * w, c), lambda i: (i, 0, 0, 0)),
        out_shape=jax.ShapeDtypeStruct((n, 2 * h, 2 * w, c), _ACT_DTYPE),
        compiler_params=_cparams(1),
    )(x.astype(_ACT_DTYPE), aw, res.astype(_ACT_DTYPE))


# --------------------------------------------------------------------------
# Detect head (lane-dense store, sliced in the wrapper)
# --------------------------------------------------------------------------

def detect_head(x, w, b, na, nc):
    # TODO(synk): Detect source not provided; emits raw per-anchor maps only
    # (no sigmoid / anchor-grid decode).
    n, h, wd, _ = x.shape
    n_raw = na * (nc + 5)
    n_pad = max(128, ((n_raw + 127) // 128) * 128)   # lane-dense (unmasked) stores
    w_pad = jnp.zeros((w.shape[0], n_pad), w.dtype).at[:, :n_raw].set(w)
    b_pad = jnp.zeros((n_pad,), b.dtype).at[:n_raw].set(b)
    y = conv1x1(x, w_pad, b_pad, act=False, out_dtype=jnp.float32)
    y = y[..., :n_raw].reshape(n, h, wd, na, nc + 5)
    return jnp.transpose(y, (0, 3, 1, 2, 4))          # (N, na, H, W, nc+5)


# --------------------------------------------------------------------------
# Parameters (deterministic synthetic init)
# --------------------------------------------------------------------------

class _ParamGen:
    def __init__(self, key):
        self._key = key

    def conv(self, cin, cout, k=1):
        self._key, k1, k2 = jax.random.split(self._key, 3)
        fan_in = cin * k * k
        w = jax.random.normal(k1, (fan_in, cout), jnp.float32) / jnp.sqrt(float(fan_in))
        b = jax.random.normal(k2, (cout,), jnp.float32) * 0.01
        return w, b


def build_params(key, ch, nc, na):
    pg = _ParamGen(key)
    p = {}
    # ---- b1 ----
    p["b1_focus"] = pg.conv(ch, 64)    # TODO(synk): Focus(in_ch, 32, pool_type='Max') source not provided.
    p["b1_cat1"] = pg.conv(64, 128)    # TODO(synk): Catneck source not provided (out = in + cat_ch*nblocks).
    p["b1_conv"] = pg.conv(128, 64)
    p["b1_cat2"] = pg.conv(64, 192)
    # ---- b2 ----
    p["b2_conv"] = pg.conv(192, 128)
    p["b2_cat"] = pg.conv(128, 368)
    # ---- b3 ----
    p["b3_conv"] = pg.conv(368, 128)
    p["b3_cat"] = pg.conv(128, 256)
    # ---- h1 ----
    p["h1_incept"] = pg.conv(192, 104)  # TODO(synk): Incept source not provided.
    p["h1_c1"] = pg.conv(104, 48)
    p["h1_c2"] = pg.conv(48, 48, 3)
    p["h1_c3"] = pg.conv(48, 48)
    p["h1_c4"] = pg.conv(48, 64, 3)
    # ---- h2 ----
    p["h2_incept"] = pg.conv(368, 160)  # TODO(synk): Incept source not provided.
    p["h2_c1"] = pg.conv(160, 96)
    p["h2_c2"] = pg.conv(96, 48, 3)
    p["h2_c3"] = pg.conv(48, 96)
    p["h2_c4"] = pg.conv(96, 64, 3)
    # ---- h3 ----
    p["h3_c1"] = pg.conv(256, 128)
    p["h3_c2"] = pg.conv(128, 64, 3)
    p["h3_c3"] = pg.conv(64, 128)
    p["h3_c4"] = pg.conv(128, 64, 3)
    # ---- detect ----
    p["det"] = pg.conv(64, na * (nc + 5))  # TODO(synk): Detect source not provided.
    return p


# --------------------------------------------------------------------------
# Forward pass (mirrors YOLO.forward structure)
# --------------------------------------------------------------------------

def yolo_forward(params, x_nchw, nc, na):
    x = jnp.transpose(x_nchw, (0, 2, 3, 1)).astype(_ACT_DTYPE)   # NCHW -> NHWC, bf16

    # ---- b1 ----
    y = maxpool2(x)                                  # Focus downsample (pool_type='Max') stand-in
    y = conv1x1_chain(y, [params["b1_focus"] + (True,),          # fused 1x1 chain
                          params["b1_cat1"] + (True,),
                          params["b1_conv"] + (True,)])
    y = maxpool2(y)
    b1 = conv1x1(y, *params["b1_cat2"])              # (N, H/4, W/4, 192)

    # ---- b2 ----
    y = conv1x1(b1, *params["b2_conv"])
    y = maxpool2(y)
    b2 = conv1x1(y, *params["b2_cat"])               # (N, H/8, W/8, 368)

    # ---- b3 ----
    y = conv1x1(b2, *params["b3_conv"])
    y = maxpool2(y)
    b3 = conv1x1(y, *params["b3_cat"])               # (N, H/16, W/16, 256)

    # ---- h3 ----
    y = conv1x1(b3, *params["h3_c1"])
    y = conv3x3(y, *params["h3_c2"])
    y = conv1x1(y, *params["h3_c3"])
    h3 = conv3x3(y, *params["h3_c4"])                # (N, H/16, W/16, 64)

    # ---- h2 ----
    y = conv1x1_chain(b2, [params["h2_incept"] + (True,),        # fused incept->c1
                           params["h2_c1"] + (True,)])
    y = conv3x3(y, *params["h2_c2"])
    y = conv1x1(y, *params["h2_c3"])
    h2 = conv3x3(y, *params["h2_c4"])                # (N, H/8, W/8, 64)

    # ---- h1 ----
    y = conv1x1_chain(b1, [params["h1_incept"] + (True,),        # fused incept->c1
                           params["h1_c1"] + (True,)])
    y = conv3x3(y, *params["h1_c2"])
    y = conv1x1(y, *params["h1_c3"])
    h1 = conv3x3(y, *params["h1_c4"])                # (N, H/4, W/4, 64)

    # out_put = up(up(h3(b3)) + h2(b2)) + h1(b1)   (adds fused into the upsample)
    y = upsample2_add(h3, h2)
    out_put = upsample2_add(y, h1)                   # (N, H/4, W/4, 64)

    det = detect_head(out_put, *params["det"], na=na, nc=nc)
    return [det]


# --------------------------------------------------------------------------

if __name__ == "__main__":
    nc = 2
    anchors = [[10, 13, 16, 30, 33, 23]]             # one detection level, 3 anchors
    na = len(anchors[0]) // 2
    ch = 3

    key = jax.random.PRNGKey(0)
    kx, kp = jax.random.split(key)
    x = jax.random.normal(kx, (2, ch, 32, 32), jnp.float32)   # NCHW, like the PyTorch module
    params = build_params(kp, ch, nc, na)

    out = yolo_forward(params, x, nc, na)
    det = jax.block_until_ready(out[0])
    assert det.shape == (2, na, 8, 8, nc + 5), det.shape
    print("KERNEL_OK")
</pallas_src>

<mosaic_0001>
module attributes {stable_mosaic.version = 11 : i64} {
  func.func @_maxpool2_kernel(%arg0: i32, %arg1: memref<1x16x2x16x6xbf16, #tpu.memory_space<vmem>>, %arg2: memref<1x16x16x3xbf16, #tpu.memory_space<vmem>>) attributes {dimension_semantics = [#tpu.dimension_semantics<parallel>], iteration_bounds = array<i64: 2>, scalar_prefetch = 0 : i64, scratch_operands = 0 : i64, tpu.core_type = #tpu.core_type<tc>, window_params = [{transform_indices = @transform_0, window_bounds = array<i64: 1, 16, 2, 16, 6>}, {transform_indices = @transform_1, window_bounds = array<i64: 1, 16, 16, 3>}]} {
    %c0 = arith.constant 0 : index
    %c0_0 = arith.constant 0 : index
    %c0_1 = arith.constant 0 : index
    %c0_2 = arith.constant 0 : index
    %c0_3 = arith.constant 0 : index
    %0 = vector.load %arg1[%c0, %c0_0, %c0_1, %c0_2, %c0_3] : memref<1x16x2x16x6xbf16, #tpu.memory_space<vmem>>, vector<1x16x1x16x3xbf16>
    %1 = vector.shape_cast %0 : vector<1x16x1x16x3xbf16> to vector<16x16x3xbf16>
    %c0_4 = arith.constant 0 : index
    %c0_5 = arith.constant 0 : index
    %c0_6 = arith.constant 0 : index
    %c0_7 = arith.constant 0 : index
    %c3 = arith.constant 3 : index
    %2 = vector.load %arg1[%c0_4, %c0_5, %c0_6, %c0_7, %c3] : memref<1x16x2x16x6xbf16, #tpu.memory_space<vmem>>, vector<1x16x1x16x3xbf16>
    %3 = vector.shape_cast %2 : vector<1x16x1x16x3xbf16> to vector<16x16x3xbf16>
    %c0_8 = arith.constant 0 : index
    %c0_9 = arith.constant 0 : index
    %c1 = arith.constant 1 : index
    %c0_10 = arith.constant 0 : index
    %c0_11 = arith.constant 0 : index
    %4 = vector.load %arg1[%c0_8, %c0_9, %c1, %c0_10, %c0_11] : memref<1x16x2x16x6xbf16, #tpu.memory_space<vmem>>, vector<1x16x1x16x3xbf16>
    %5 = vector.shape_cast %4 : vector<1x16x1x16x3xbf16> to vector<16x16x3xbf16>
    %c0_12 = arith.constant 0 : index
    %c0_13 = arith.constant 0 : index
    %c1_14 = arith.constant 1 : index
    %c0_15 = arith.constant 0 : index
    %c3_16 = arith.constant 3 : index
    %6 = vector.load %arg1[%c0_12, %c0_13, %c1_14, %c0_15, %c3_16] : memref<1x16x2x16x6xbf16, #tpu.memory_space<vmem>>, vector<1x16x1x16x3xbf16>
    %7 = vector.shape_cast %6 : vector<1x16x1x16x3xbf16> to vector<16x16x3xbf16>
    %8 = arith.maximumf %1, %3 : vector<16x16x3xbf16>
    %9 = arith.maximumf %5, %7 : vector<16x16x3xbf16>
    %10 = arith.maximumf %8, %9 : vector<16x16x3xbf16>
    %c0_17 = arith.constant 0 : index
    %c0_18 = arith.constant 0 : index
    %c0_19 = arith.constant 0 : index
    %c0_20 = arith.constant 0 : index
    %11 = vector.load %arg2[%c0_17, %c0_18, %c0_19, %c0_20] : memref<1x16x16x3xbf16, #tpu.memory_space<vmem>>, vector<1x16x16x3xbf16>
    %12 = vector.shape_cast %11 : vector<1x16x16x3xbf16> to vector<16x16x3xbf16>
    %13 = vector.shape_cast %10 : vector<16x16x3xbf16> to vector<1x16x16x3xbf16>
    tpu.vector_store %arg2[%c0_17, %c0_18, %c0_19, %c0_20], %13 {strides = array<i32>} : memref<1x16x16x3xbf16, #tpu.memory_space<vmem>>, vector<1x16x16x3xbf16>,
    return
  }
  func.func @transform_0(%arg0: i32) -> (i32, i32, i32, i32, i32) {
    %c0_i32 = arith.constant 0 : i32
    %c0_i32_0 = arith.constant 0 : i32
    %c0_i32_1 = arith.constant 0 : i32
    %c0_i32_2 = arith.constant 0 : i32
    %c0_i32_3 = arith.constant 0 : i32
    return %arg0, %c0_i32, %c0_i32_0, %c0_i32_1, %c0_i32_2 : i32, i32, i32, i32, i32
  }
  func.func @transform_1(%arg0: i32) -> (i32, i32, i32, i32) {
    %c0_i32 = arith.constant 0 : i32
    %c0_i32_0 = arith.constant 0 : i32
    %c0_i32_1 = arith.constant 0 : i32
    %c0_i32_2 = arith.constant 0 : i32
    return %arg0, %c0_i32, %c0_i32_0, %c0_i32_1 : i32, i32, i32, i32
  }
}

</mosaic_0001>

<llo_original>
// kernel: tpu_custom_call.1
$region0: #{tpu_custom_call.1}
  #allocation0 [shape = 'u32[]', space=smem, size = 0x4, offset = 0x4, fixed_abs, tag = 'smem constant byte address 0x4 - core index']
  #allocation1 [shape = 'u32[144,128]{1,0:T(1,128)}', space=vmem, size = 0x12000, scoped, tag = 'internal scratch']
  %s0 = inlined_call_operand.hbm [shape: bf16[2,16,2,16,6], index: 0, kind: input, shape index: {}]
  %s1 = inlined_call_operand.hbm [shape: bf16[2,16,16,3], index: 1, kind: output, shape index: {}]
  %s2 = sld [smem:[#allocation0]]
  $region41: #{tpu_custom_call.1} parent=0
    _
  %s4 = ssub.s32 1, %s2
  %s5 = scalar_select 0, %s4, %s2
  $region1: #{tpu_custom_call.1} parent=0
    #allocation2 [shape = 'u8[262144]{0}', space=vmem, size = 0x40000, scoped, tag = 'input window, operand 0']
    #allocation3 [shape = 's32[2]{0}', space=sflag, size = 0x8, scoped, tag = 'scoped memory for tpu_custom_call.1']
    #allocation4 [shape = 's32[2]{0}', space=sflag, size = 0x8, scoped, tag = 'scoped memory for tpu_custom_call.1']
    #allocation5 [shape = 'u8[131072]{0}', space=vmem, size = 0x20000, scoped, tag = 'output window, operand 0']
    %6 = vsyncpa [#allocation3], 0
    %s7 = scalar_lea.sflag [#allocation3], 1
    %8 = vsyncpa %s7, 0
    %9 = vsyncpa [#allocation4], 0
    %s10 = scalar_lea.sflag [#allocation4], 1
    %11 = vsyncpa %s10, 0
    loop: start=0, step=1, limit=4
    $region2: #{tpu_custom_call.1} parent=1 // loop_pre_header
      _
    $region3: #{tpu_custom_call.1} parent=1 // loop_header
      %s13 = sphi 0, %s17
      %p14 = scmp.ge.s32.totalorder %s13, 4
      %s23 = sphi 0, %s25
      %s26 = sphi 0, %s23
      %s27 = sphi 0, %s26
      %s43 = sphi 0, %s27
      %s49 = sphi 0, %s51
      %s52 = sphi 0, %s49
      %s53 = sphi 0, %s52
      %s69 = sphi 0, %s53
    $region4: #{tpu_custom_call.1} parent=1 // loop_header_branch
      %16 = sbr.rel (%p14) target = $region8
    $region5: #{tpu_custom_call.1} parent=1 // loop_body
      %s18 = ssub.s32 %s13, 1
      %s19 = ssub.s32 %s13, 2
      %s20 = sadd.s32 %s13, 1
      %s21 = ssub.s32 %s13, %s20
      %p22 = scmp.eq.s32.totalorder %s21, 0
      %s24 = sadd.s32 %s23, 1
      %s25 = scalar_select %p22, %s23, %s24
      %p28 = pneg %p22
      %p29 = scmp.eq.s32.totalorder %s13, 1
      %p30 = por %p28, %p29
      %p31 = scmp.ne.s32.totalorder %s23, %s26
      %p32 = scmp.eq.s32.totalorder %s13, 0
      %p33 = por %p31, %p32
      %p34 = scmp.ne.s32.totalorder %s23, %s26
      %p35 = scmp.eq.s32.totalorder %s18, 1
      %p36 = por %p34, %p35
      %p37 = scmp.ne.s32.totalorder %s26, %s27
      %p38 = scmp.eq.s32.totalorder %s18, 0
      %p39 = por %p37, %p38
      %p40 = scmp.ne.s32.totalorder %s26, %s27
      %p41 = scmp.eq.s32.totalorder %s19, 1
      %p42 = por %p40, %p41
      %p44 = scmp.ne.s32.totalorder %s27, %s43
      %p45 = scmp.eq.s32.totalorder %s19, 0
      %p46 = por %p44, %p45
      %s47 = ssub.s32 %s13, %s20
      %p48 = scmp.eq.s32.totalorder %s47, 0
      %s50 = sadd.s32 %s49, 1
      %s51 = scalar_select %p48, %s49, %s50
      %p54 = pneg %p48
      %p55 = scmp.eq.s32.totalorder %s13, 1
      %p56 = por %p54, %p55
      %p57 = scmp.ne.s32.totalorder %s49, %s52
      %p58 = scmp.eq.s32.totalorder %s13, 0
      %p59 = por %p57, %p58
      %p60 = scmp.ne.s32.totalorder %s49, %s52
      %p61 = scmp.eq.s32.totalorder %s18, 1
      %p62 = por %p60, %p61
      %p63 = scmp.ne.s32.totalorder %s52, %s53
      %p64 = scmp.eq.s32.totalorder %s18, 0
      %p65 = por %p63, %p64
      %p66 = scmp.ne.s32.totalorder %s52, %s53
      %p67 = scmp.eq.s32.totalorder %s19, 1
      %p68 = por %p66, %p67
      %p70 = scmp.ne.s32.totalorder %s53, %s69
      %p71 = scmp.eq.s32.totalorder %s19, 0
      %p72 = por %p70, %p71
      %p73 = scmp.le.s32.totalorder 1, %s13
      %p74 = scmp.lt.s32.totalorder %s13, 3
      %p75 = pnand %p73, %p74
      %p76 = pneg %p75
      // Predicated region
      $region9: #{tpu_custom_call.1} parent=5 // pred_check
        _
      $region10: #{tpu_custom_call.1} parent=5 // pred_check_branch
        %78 = sbr.rel (%p75) target = $region12
      $region11: #{tpu_custom_call.1} parent=5 // pred_region
        %s79 = ssub.s32 %s13, 1
      $region12: #{tpu_custom_call.1} parent=5 // pred_fallthru
        _
      %p80 = scmp.lt.s32.totalorder %s13, 2
      // Predicated region
      $region13: #{tpu_custom_call.1} parent=5 // pred_check
        %p81 = pneg %p80
      $region14: #{tpu_custom_call.1} parent=5 // pred_check_branch
        %83 = sbr.rel (%p81) target = $region16
      $region15: #{tpu_custom_call.1} parent=5 // pred_region
        // Predicated region
        $region17: #{tpu_custom_call.1} parent=15 // pred_check
          %p84 = pneg %p33
        $region18: #{tpu_custom_call.1} parent=15 // pred_check_branch
          %86 = sbr.rel (%p84) target = $region20
        $region19: #{tpu_custom_call.1} parent=15 // pred_region
          %s87 = sand.u32 %s23, 1
          %s88 = scalar_lea.sflag [#allocation3], %s87
          %s89 = sand.u32 %s23, 1
          %s90 = smul.addr %s89, 256
          %s91 = scalar_lea.vmem [#allocation2], %s90
          %s93 = ssub.s32 4096, 4096
          %94 = vsyncadd %s88, %s93
          %s95 = smul.addr %s13, 64
          %s96 = smul.addr %s95, 64
          %s97 = scalar_lea.hbm %s0, %s96
          %s98 = sshll.u32 %s91, 4
          %s99 = int_to_ptr.vmem [resolvable:$true] %s98
          %104 = dma.hbm_to_vmem [thread:$0]  %s97, 4096, %s99, %s88, 64, 64, 4
        $region20: #{tpu_custom_call.1} parent=15 // pred_fallthru
          _
      $region16: #{tpu_custom_call.1} parent=5 // pred_fallthru
        _
      %p105 = scmp.le.s32.totalorder 1, %s13
      %p106 = scmp.lt.s32.totalorder %s13, 3
      %p107 = pnand %p105, %p106
      %p108 = pneg %p107
      // Predicated region
      $region21: #{tpu_custom_call.1} parent=5 // pred_check
        _
      $region22: #{tpu_custom_call.1} parent=5 // pred_check_branch
        %110 = sbr.rel (%p107) target = $region24
      $region23: #{tpu_custom_call.1} parent=5 // pred_region
        %s111 = ssub.s32 %s13, 1
        %s112 = sand.u32 %s26, 1
        %s113 = scalar_lea.sflag [#allocation3], %s112
        %s114 = sand.u32 %s26, 1
        %s115 = smul.addr %s114, 256
        %s116 = scalar_lea.vmem [#allocation2], %s115
        // Predicated region
        $region25: #{tpu_custom_call.1} parent=23 // pred_check
          %p117 = pneg %p39
        $region26: #{tpu_custom_call.1} parent=23 // pred_check_branch
          %119 = sbr.rel (%p117) target = $region28
        $region27: #{tpu_custom_call.1} parent=23 // pred_region
          %120 = dma.done %s113, 4096
        $region28: #{tpu_custom_call.1} parent=23 // pred_fallthru
          _
        %s121 = sand.u32 %s26, 1
        %s122 = scalar_lea.sflag [#allocation3], %s121
        %s123 = sand.u32 %s26, 1
        %s124 = smul.addr %s123, 256
        %s125 = scalar_lea.vmem [#allocation2], %s124
        %p126 = pneg %p39
        %p127 = pneg %p36
        %p128 = pneg %p65
        %p129 = pneg %p62
        %s130 = sand.u32 %s52, 1
        %s131 = scalar_lea.sflag [#allocation4], %s130
        %s132 = sand.u32 %s52, 1
        %s133 = smul.addr %s132, 128
        %s134 = scalar_lea.vmem [#allocation5], %s133
        %v135 = vld [vmem:[%s116] sm:$0xf]
        %v136 = vld [vmem:[%s116 + $0x4] sm:$0xf]
        %v137 = vld [vmem:[%s116 + $0x10] sm:$0xf]
        %v138 = vld [vmem:[%s116 + $0x14] sm:$0xf]
        %v139 = vld [vmem:[%s116 + $0x20] sm:$0xf]
        %v140 = vld [vmem:[%s116 + $0x24] sm:$0xf]
        %v141 = vld [vmem:[%s116 + $0x30] sm:$0xf]
        %v142 = vld [vmem:[%s116 + $0x34] sm:$0xf]
        %v143 = vld [vmem:[%s116 + $0x40] sm:$0xf]
        %v144 = vld [vmem:[%s116 + $0x44] sm:$0xf]
        %v145 = vld [vmem:[%s116 + $0x50] sm:$0xf]
        %v146 = vld [vmem:[%s116 + $0x54] sm:$0xf]
        %v147 = vld [vmem:[%s116 + $0x60] sm:$0xf]
        %v148 = vld [vmem:[%s116 + $0x64] sm:$0xf]
        %v149 = vld [vmem:[%s116 + $0x70] sm:$0xf]
        %v150 = vld [vmem:[%s116 + $0x74] sm:$0xf]
        %v151 = vld [vmem:[%s116 + $0x80] sm:$0xf]
        %v152 = vld [vmem:[%s116 + $0x84] sm:$0xf]
        %v153 = vld [vmem:[%s116 + $0x90] sm:$0xf]
        %v154 = vld [vmem:[%s116 + $0x94] sm:$0xf]
        %v155 = vld [vmem:[%s116 + $0xa0] sm:$0xf]
        %v156 = vld [vmem:[%s116 + $0xa4] sm:$0xf]
        %v157 = vld [vmem:[%s116 + $0xb0] sm:$0xf]
        %v158 = vld [vmem:[%s116 + $0xb4] sm:$0xf]
        %v159 = vld [vmem:[%s116 + $0xc0] sm:$0xf]
        %v160 = vld [vmem:[%s116 + $0xc4] sm:$0xf]
        %v161 = vld [vmem:[%s116 + $0xd0] sm:$0xf]
        %v162 = vld [vmem:[%s116 + $0xd4] sm:$0xf]
        %v163 = vld [vmem:[%s116 + $0xe0] sm:$0xf]
        %v164 = vld [vmem:[%s116 + $0xe4] sm:$0xf]
        %v165 = vld [vmem:[%s116 + $0xf0] sm:$0xf]
        %v166 = vld [vmem:[%s116 + $0xf4] sm:$0xf]
        %s167 = scalar_lea.vmem %s116, 8 [#allocation2]
        %v168 = vld [vmem:[%s167] sm:$0xf]
        %v169 = vld [vmem:[%s167 + $0x4] sm:$0xf]
        %v170 = vld [vmem:[%s167 + $0x10] sm:$0xf]
        %v171 = vld [vmem:[%s167 + $0x14] sm:$0xf]
        %v172 = vld [vmem:[%s167 + $0x20] sm:$0xf]
        %v173 = vld [vmem:[%s167 + $0x24] sm:$0xf]
        %v174 = vld [vmem:[%s167 + $0x30] sm:$0xf]
        %v175 = vld [vmem:[%s167 + $0x34] sm:$0xf]
        %v176 = vld [vmem:[%s167 + $0x40] sm:$0xf]
        %v177 = vld [vmem:[%s167 + $0x44] sm:$0xf]
        %v178 = vld [vmem:[%s167 + $0x50] sm:$0xf]
        %v179 = vld [vmem:[%s167 + $0x54] sm:$0xf]
        %v180 = vld [vmem:[%s167 + $0x60] sm:$0xf]
        %v181 = vld [vmem:[%s167 + $0x64] sm:$0xf]
        %v182 = vld [vmem:[%s167 + $0x70] sm:$0xf]
        %v183 = vld [vmem:[%s167 + $0x74] sm:$0xf]
        %v184 = vld [vmem:[%s167 + $0x80] sm:$0xf]
        %v185 = vld [vmem:[%s167 + $0x84] sm:$0xf]
        %v186 = vld [vmem:[%s167 + $0x90] sm:$0xf]
        %v187 = vld [vmem:[%s167 + $0x94] sm:$0xf]
        %v188 = vld [vmem:[%s167 + $0xa0] sm:$0xf]
        %v189 = vld [vmem:[%s167 + $0xa4] sm:$0xf]
        %v190 = vld [vmem:[%s167 + $0xb0] sm:$0xf]
        %v191 = vld [vmem:[%s167 + $0xb4] sm:$0xf]
        %v192 = vld [vmem:[%s167 + $0xc0] sm:$0xf]
        %v193 = vld [vmem:[%s167 + $0xc4] sm:$0xf]
        %v194 = vld [vmem:[%s167 + $0xd0] sm:$0xf]
        %v195 = vld [vmem:[%s167 + $0xd4] sm:$0xf]
        %v196 = vld [vmem:[%s167 + $0xe0] sm:$0xf]
        %v197 = vld [vmem:[%s167 + $0xe4] sm:$0xf]
        %v198 = vld [vmem:[%s167 + $0xf0] sm:$0xf]
        %v199 = vld [vmem:[%s167 + $0xf4] sm:$0xf]
        %232 = vrot.lane.b32.xlu0 %v135, 125
        %v233 = vpop.permute.xlu0 %232
        %234 = vrot.lane.b32.xlu0 %v136, 125
        %v235 = vpop.permute.xlu0 %234
        %236 = vrot.lane.b32.xlu0 %v137, 125
        %v237 = vpop.permute.xlu0 %236
        %238 = vrot.lane.b32.xlu0 %v138, 125
        %v239 = vpop.permute.xlu0 %238
        %240 = vrot.lane.b32.xlu0 %v139, 125
        %v241 = vpop.permute.xlu0 %240
        %242 = vrot.lane.b32.xlu0 %v140, 125
        %v243 = vpop.permute.xlu0 %242
        %244 = vrot.lane.b32.xlu0 %v141, 125
        %v245 = vpop.permute.xlu0 %244
        %246 = vrot.lane.b32.xlu0 %v142, 125
        %v247 = vpop.permute.xlu0 %246
        %248 = vrot.lane.b32.xlu0 %v143, 125
        %v249 = vpop.permute.xlu0 %248
        %250 = vrot.lane.b32.xlu0 %v144, 125
        %v251 = vpop.permute.xlu0 %250
        %252 = vrot.lane.b32.xlu0 %v145, 125
        %v253 = vpop.permute.xlu0 %252
        %254 = vrot.lane.b32.xlu0 %v146, 125
        %v255 = vpop.permute.xlu0 %254
        %256 = vrot.lane.b32.xlu0 %v147, 125
        %v257 = vpop.permute.xlu0 %256
        %258 = vrot.lane.b32.xlu0 %v148, 125
        %v259 = vpop.permute.xlu0 %258
        %260 = vrot.lane.b32.xlu0 %v149, 125
        %v261 = vpop.permute.xlu0 %260
        %262 = vrot.lane.b32.xlu0 %v150, 125
        %v263 = vpop.permute.xlu0 %262
        %264 = vrot.lane.b32.xlu0 %v151, 125
        %v265 = vpop.permute.xlu0 %264
        %266 = vrot.lane.b32.xlu0 %v152, 125
        %v267 = vpop.permute.xlu0 %266
        %268 = vrot.lane.b32.xlu0 %v153, 125
        %v269 = vpop.permute.xlu0 %268
        %270 = vrot.lane.b32.xlu0 %v154, 125
        %v271 = vpop.permute.xlu0 %270
        %272 = vrot.lane.b32.xlu0 %v155, 125
        %v273 = vpop.permute.xlu0 %272
        %274 = vrot.lane.b32.xlu0 %v156, 125
        %v275 = vpop.permute.xlu0 %274
        %276 = vrot.lane.b32.xlu0 %v157, 125
        %v277 = vpop.permute.xlu0 %276
        %278 = vrot.lane.b32.xlu0 %v158, 125
        %v279 = vpop.permute.xlu0 %278
        %280 = vrot.lane.b32.xlu0 %v159, 125
        %v281 = vpop.permute.xlu0 %280
        %282 = vrot.lane.b32.xlu0 %v160, 125
        %v283 = vpop.permute.xlu0 %282
        %284 = vrot.lane.b32.xlu0 %v161, 125
        %v285 = vpop.permute.xlu0 %284
        %286 = vrot.lane.b32.xlu0 %v162, 125
        %v287 = vpop.permute.xlu0 %286
        %288 = vrot.lane.b32.xlu0 %v163, 125
        %v289 = vpop.permute.xlu0 %288
        %290 = vrot.lane.b32.xlu0 %v164, 125
        %v291 = vpop.permute.xlu0 %290
        %292 = vrot.lane.b32.xlu0 %v165, 125
        %v293 = vpop.permute.xlu0 %292
        %294 = vrot.lane.b32.xlu0 %v166, 125
        %v295 = vpop.permute.xlu0 %294
        %v328 = vmax.bf16 %v135, %v233
        %v329 = vmax.bf16 %v136, %v235
        %v330 = vmax.bf16 %v137, %v237
        %v331 = vmax.bf16 %v138, %v239
        %v332 = vmax.bf16 %v139, %v241
        %v333 = vmax.bf16 %v140, %v243
        %v334 = vmax.bf16 %v141, %v245
        %v335 = vmax.bf16 %v142, %v247
        %v336 = vmax.bf16 %v143, %v249
        %v337 = vmax.bf16 %v144, %v251
        %v338 = vmax.bf16 %v145, %v253
        %v339 = vmax.bf16 %v146, %v255
        %v340 = vmax.bf16 %v147, %v257
        %v341 = vmax.bf16 %v148, %v259
        %v342 = vmax.bf16 %v149, %v261
        %v343 = vmax.bf16 %v150, %v263
        %v344 = vmax.bf16 %v151, %v265
        %v345 = vmax.bf16 %v152, %v267
        %v346 = vmax.bf16 %v153, %v269
        %v347 = vmax.bf16 %v154, %v271
        %v348 = vmax.bf16 %v155, %v273
        %v349 = vmax.bf16 %v156, %v275
        %v350 = vmax.bf16 %v157, %v277
        %v351 = vmax.bf16 %v158, %v279
        %v352 = vmax.bf16 %v159, %v281
        %v353 = vmax.bf16 %v160, %v283
        %v354 = vmax.bf16 %v161, %v285
        %v355 = vmax.bf16 %v162, %v287
        %v356 = vmax.bf16 %v163, %v289
        %v357 = vmax.bf16 %v164, %v291
        %v358 = vmax.bf16 %v165, %v293
        %v359 = vmax.bf16 %v166, %v295
        %392 = vrot.lane.b32.xlu0 %v168, 125
        %v393 = vpop.permute.xlu0 %392
        %394 = vrot.lane.b32.xlu0 %v169, 125
        %v395 = vpop.permute.xlu0 %394
        %396 = vrot.lane.b32.xlu0 %v170, 125
        %v397 = vpop.permute.xlu0 %396
        %398 = vrot.lane.b32.xlu0 %v171, 125
        %v399 = vpop.permute.xlu0 %398
        %400 = vrot.lane.b32.xlu0 %v172, 125
        %v401 = vpop.permute.xlu0 %400
        %402 = vrot.lane.b32.xlu0 %v173, 125
        %v403 = vpop.permute.xlu0 %402
        %404 = vrot.lane.b32.xlu0 %v174, 125
        %v405 = vpop.permute.xlu0 %404
        %406 = vrot.lane.b32.xlu0 %v175, 125
        %v407 = vpop.permute.xlu0 %406
        %408 = vrot.lane.b32.xlu0 %v176, 125
        %v409 = vpop.permute.xlu0 %408
        %410 = vrot.lane.b32.xlu0 %v177, 125
        %v411 = vpop.permute.xlu0 %410
        %412 = vrot.lane.b32.xlu0 %v178, 125
        %v413 = vpop.permute.xlu0 %412
        %414 = vrot.lane.b32.xlu0 %v179, 125
        %v415 = vpop.permute.xlu0 %414
        %416 = vrot.lane.b32.xlu0 %v180, 125
        %v417 = vpop.permute.xlu0 %416
        %418 = vrot.lane.b32.xlu0 %v181, 125
        %v419 = vpop.permute.xlu0 %418
        %420 = vrot.lane.b32.xlu0 %v182, 125
        %v421 = vpop.permute.xlu0 %420
        %422 = vrot.lane.b32.xlu0 %v183, 125
        %v423 = vpop.permute.xlu0 %422
        %424 = vrot.lane.b32.xlu0 %v184, 125
        %v425 = vpop.permute.xlu0 %424
        %426 = vrot.lane.b32.xlu0 %v185, 125
        %v427 = vpop.permute.xlu0 %426
        %428 = vrot.lane.b32.xlu0 %v186, 125
        %v429 = vpop.permute.xlu0 %428
        %430 = vrot.lane.b32.xlu0 %v187, 125
        %v431 = vpop.permute.xlu0 %430
        %432 = vrot.lane.b32.xlu0 %v188, 125
        %v433 = vpop.permute.xlu0 %432
        %434 = vrot.lane.b32.xlu0 %v189, 125
        %v435 = vpop.permute.xlu0 %434
        %436 = vrot.lane.b32.xlu0 %v190, 125
        %v437 = vpop.permute.xlu0 %436
        %438 = vrot.lane.b32.xlu0 %v191, 125
        %v439 = vpop.permute.xlu0 %438
        %440 = vrot.lane.b32.xlu0 %v192, 125
        %v441 = vpop.permute.xlu0 %440
        %442 = vrot.lane.b32.xlu0 %v193, 125
        %v443 = vpop.permute.xlu0 %442
        %444 = vrot.lane.b32.xlu0 %v194, 125
        %v445 = vpop.permute.xlu0 %444
        %446 = vrot.lane.b32.xlu0 %v195, 125
        %v447 = vpop.permute.xlu0 %446
        %448 = vrot.lane.b32.xlu0 %v196, 125
        %v449 = vpop.permute.xlu0 %448
        %450 = vrot.lane.b32.xlu0 %v197, 125
        %v451 = vpop.permute.xlu0 %450
        %452 = vrot.lane.b32.xlu0 %v198, 125
        %v453 = vpop.permute.xlu0 %452
        %454 = vrot.lane.b32.xlu0 %v199, 125
        %v455 = vpop.permute.xlu0 %454
        %v488 = vmax.bf16 %v168, %v393
        %v489 = vmax.bf16 %v169, %v395
        %v490 = vmax.bf16 %v170, %v397
        %v491 = vmax.bf16 %v171, %v399
        %v492 = vmax.bf16 %v172, %v401
        %v493 = vmax.bf16 %v173, %v403
        %v494 = vmax.bf16 %v174, %v405
        %v495 = vmax.bf16 %v175, %v407
        %v496 = vmax.bf16 %v176, %v409
        %v497 = vmax.bf16 %v177, %v411
        %v498 = vmax.bf16 %v178, %v413
        %v499 = vmax.bf16 %v179, %v415
        %v500 = vmax.bf16 %v180, %v417
        %v501 = vmax.bf16 %v181, %v419
        %v502 = vmax.bf16 %v182, %v421
        %v503 = vmax.bf16 %v183, %v423
        %v504 = vmax.bf16 %v184, %v425
        %v505 = vmax.bf16 %v185, %v427
        %v506 = vmax.bf16 %v186, %v429
        %v507 = vmax.bf16 %v187, %v431
        %v508 = vmax.bf16 %v188, %v433
        %v509 = vmax.bf16 %v189, %v435
        %v510 = vmax.bf16 %v190, %v437
        %v511 = vmax.bf16 %v191, %v439
        %v512 = vmax.bf16 %v192, %v441
        %v513 = vmax.bf16 %v193, %v443
        %v514 = vmax.bf16 %v194, %v445
        %v515 = vmax.bf16 %v195, %v447
        %v516 = vmax.bf16 %v196, %v449
        %v517 = vmax.bf16 %v197, %v451
        %v518 = vmax.bf16 %v198, %v453
        %v519 = vmax.bf16 %v199, %v455
        %v520 = vmax.bf16 %v328, %v488
        %v521 = vmax.bf16 %v329, %v489
        %v522 = vmax.bf16 %v330, %v490
        %v523 = vmax.bf16 %v331, %v491
        %v524 = vmax.bf16 %v332, %v492
        %v525 = vmax.bf16 %v333, %v493
        %v526 = vmax.bf16 %v334, %v494
        %v527 = vmax.bf16 %v335, %v495
        %v528 = vmax.bf16 %v336, %v496
        %v529 = vmax.bf16 %v337, %v497
        %v530 = vmax.bf16 %v338, %v498
        %v531 = vmax.bf16 %v339, %v499
        %v532 = vmax.bf16 %v340, %v500
        %v533 = vmax.bf16 %v341, %v501
        %v534 = vmax.bf16 %v342, %v502
        %v535 = vmax.bf16 %v343, %v503
        %v536 = vmax.bf16 %v344, %v504
        %v537 = vmax.bf16 %v345, %v505
        %v538 = vmax.bf16 %v346, %v506
        %v539 = vmax.bf16 %v347, %v507
        %v540 = vmax.bf16 %v348, %v508
        %v541 = vmax.bf16 %v349, %v509
        %v542 = vmax.bf16 %v350, %v510
        %v543 = vmax.bf16 %v351, %v511
        %v544 = vmax.bf16 %v352, %v512
        %v545 = vmax.bf16 %v353, %v513
        %v546 = vmax.bf16 %v354, %v514
        %v547 = vmax.bf16 %v355, %v515
        %v548 = vmax.bf16 %v356, %v516
        %v549 = vmax.bf16 %v357, %v517
        %v550 = vmax.bf16 %v358, %v518
        %v551 = vmax.bf16 %v359, %v519
        %vm552 = vcmask 19456
        %553 = vst.msk [vmem:[%s134] sm:$0xf] %vm552, %v520
        %554 = vst.msk [vmem:[%s134 + $0x4] sm:$0xf] %vm552, %v521
        %555 = vst.msk [vmem:[%s134 + $0x8] sm:$0xf] %vm552, %v522
        %556 = vst.msk [vmem:[%s134 + $0xc] sm:$0xf] %vm552, %v523
        %557 = vst.msk [vmem:[%s134 + $0x10] sm:$0xf] %vm552, %v524
        %558 = vst.msk [vmem:[%s134 + $0x14] sm:$0xf] %vm552, %v525
        %559 = vst.msk [vmem:[%s134 + $0x18] sm:$0xf] %vm552, %v526
        %560 = vst.msk [vmem:[%s134 + $0x1c] sm:$0xf] %vm552, %v527
        %561 = vst.msk [vmem:[%s134 + $0x20] sm:$0xf] %vm552, %v528
        %562 = vst.msk [vmem:[%s134 + $0x24] sm:$0xf] %vm552, %v529
        %563 = vst.msk [vmem:[%s134 + $0x28] sm:$0xf] %vm552, %v530
        %564 = vst.msk [vmem:[%s134 + $0x2c] sm:$0xf] %vm552, %v531
        %565 = vst.msk [vmem:[%s134 + $0x30] sm:$0xf] %vm552, %v532
        %566 = vst.msk [vmem:[%s134 + $0x34] sm:$0xf] %vm552, %v533
        %567 = vst.msk [vmem:[%s134 + $0x38] sm:$0xf] %vm552, %v534
        %568 = vst.msk [vmem:[%s134 + $0x3c] sm:$0xf] %vm552, %v535
        %569 = vst.msk [vmem:[%s134 + $0x40] sm:$0xf] %vm552, %v536
        %570 = vst.msk [vmem:[%s134 + $0x44] sm:$0xf] %vm552, %v537
        %571 = vst.msk [vmem:[%s134 + $0x48] sm:$0xf] %vm552, %v538
        %572 = vst.msk [vmem:[%s134 + $0x4c] sm:$0xf] %vm552, %v539
        %573 = vst.msk [vmem:[%s134 + $0x50] sm:$0xf] %vm552, %v540
        %574 = vst.msk [vmem:[%s134 + $0x54] sm:$0xf] %vm552, %v541
        %575 = vst.msk [vmem:[%s134 + $0x58] sm:$0xf] %vm552, %v542
        %576 = vst.msk [vmem:[%s134 + $0x5c] sm:$0xf] %vm552, %v543
        %577 = vst.msk [vmem:[%s134 + $0x60] sm:$0xf] %vm552, %v544
        %578 = vst.msk [vmem:[%s134 + $0x64] sm:$0xf] %vm552, %v545
        %579 = vst.msk [vmem:[%s134 + $0x68] sm:$0xf] %vm552, %v546
        %580 = vst.msk [vmem:[%s134 + $0x6c] sm:$0xf] %vm552, %v547
        %581 = vst.msk [vmem:[%s134 + $0x70] sm:$0xf] %vm552, %v548
        %582 = vst.msk [vmem:[%s134 + $0x74] sm:$0xf] %vm552, %v549
        %583 = vst.msk [vmem:[%s134 + $0x78] sm:$0xf] %vm552, %v550
        %584 = vst.msk [vmem:[%s134 + $0x7c] sm:$0xf] %vm552, %v551
        %s585 = sand.u32 %s52, 1
        %s586 = scalar_lea.sflag [#allocation4], %s585
        %s587 = sand.u32 %s52, 1
        %s588 = smul.addr %s587, 128
        %s589 = scalar_lea.vmem [#allocation5], %s588
        // Predicated region
        $region29: #{tpu_custom_call.1} parent=23 // pred_check
          %p590 = pneg %p62
        $region30: #{tpu_custom_call.1} parent=23 // pred_check_branch
          %592 = sbr.rel (%p590) target = $region32
        $region31: #{tpu_custom_call.1} parent=23 // pred_region
          %s594 = ssub.s32 2048, 2048
          %595 = vsyncadd %s586, %s594
          %s596 = smul.addr %s18, 32
          %s597 = smul.addr %s596, 64
          %s598 = scalar_lea.hbm %s1, %s597
          %s599 = sshll.u32 %s589, 4
          %s600 = int_to_ptr.vmem [resolvable:$true] %s599
          %605 = dma.vmem_to_hbm [thread:$0]  %s600, 2048, %s598, %s586, 64, 64, 4
        $region32: #{tpu_custom_call.1} parent=23 // pred_fallthru
          _
      $region24: #{tpu_custom_call.1} parent=5 // pred_fallthru
        _
      %p606 = scmp.le.s32.totalorder 2, %s13
      // Predicated region
      $region33: #{tpu_custom_call.1} parent=5 // pred_check
        %p607 = pneg %p606
      $region34: #{tpu_custom_call.1} parent=5 // pred_check_branch
        %609 = sbr.rel (%p607) target = $region36
      $region35: #{tpu_custom_call.1} parent=5 // pred_region
        %s610 = ssub.s32 %s13, 2
        // Predicated region
        $region37: #{tpu_custom_call.1} parent=35 // pred_check
          %p611 = pneg %p68
        $region38: #{tpu_custom_call.1} parent=35 // pred_check_branch
          %613 = sbr.rel (%p611) target = $region40
        $region39: #{tpu_custom_call.1} parent=35 // pred_region
          %s614 = sand.u32 %s53, 1
          %s615 = scalar_lea.sflag [#allocation4], %s614
          %s616 = sand.u32 %s53, 1
          %s617 = smul.addr %s616, 128
          %s618 = scalar_lea.vmem [#allocation5], %s617
          %619 = dma.done %s615, 2048
        $region40: #{tpu_custom_call.1} parent=35 // pred_fallthru
          _
      $region36: #{tpu_custom_call.1} parent=5 // pred_fallthru
        _
    $region6: #{tpu_custom_call.1} parent=1 // loop_footer
      %s17 = sadd.s32 1, %s13
    $region7: #{tpu_custom_call.1} parent=1 // loop_footer_branch
      %12 = sbr.rel target = $region3
    $region8: #{tpu_custom_call.1} parent=1 // loop_exit
      _
    %620 = vsyncpa [#allocation3], 1
    %s621 = scalar_lea.sflag [#allocation3], 1
    %622 = vsyncpa %s621, 1
    %623 = vsyncpa [#allocation4], 1
    %s624 = scalar_lea.sflag [#allocation4], 1
    %625 = vsyncpa %s624, 1

</llo_original>
